<compile_context>
chip_gen: v5e
topology: v5e:2x2
jax: 0.10.0
libtpu: 0.0.40
codegen_flags: <defaults>
</compile_context>

<pallas_src>
import math
from functools import partial

import jax
import jax.numpy as jnp
from jax.experimental import pallas as pl
from jax.experimental.pallas import tpu as pltpu


_SQRT_HALF = 1.0 / math.sqrt(2.0)


def _erf_f32(x):
    """erf via Abramowitz & Stegun 7.1.26 (max abs err ~1.5e-7).

    Hand-rolled from exp / mul / add / select so it is guaranteed to lower in
    Mosaic (jax.scipy.special.erf has failed to lower on some builds)."""
    a1, a2, a3, a4, a5 = (0.254829592, -0.284496736, 1.421413741,
                          -1.453152027, 1.061405429)
    p = 0.3275911
    sgn = jnp.where(x < 0.0, -1.0, 1.0)
    ax = jnp.abs(x)
    t = 1.0 / (1.0 + p * ax)
    poly = ((((a5 * t + a4) * t + a3) * t + a2) * t + a1) * t
    return sgn * (1.0 - poly * jnp.exp(-ax * ax))


def _gelu_f32(x, approximate):
    if approximate:
        # tanh approximation: routed through the EUP, effectively free when
        # the step is MXU-bound.  Explicit opt-in only (changes numerics).
        return jax.nn.gelu(x, approximate=True)
    # Exact-erf GELU: matches PyTorch's default nn.GELU().
    return 0.5 * x * (1.0 + _erf_f32(x * _SQRT_HALF))


def _mlp_kernel(x_ref, w1_ref, b1_ref, w2_ref, b2_ref, o_ref, acc_ref,
                *, approximate_gelu):
    """One (token-tile, hidden-tile) grid step.

    x_ref  : (tm, C_in)      input tile (constant across the hidden axis)
    w1_ref : (C_in, tH) bf16 fc1 weight slab
    b1_ref : (1, tH)    f32  fc1 bias slab
    w2_ref : (tH, C_out) bf16 fc2 weight slab
    b2_ref : (1, C_out) f32  fc2 bias
    o_ref  : (tm, C_out)     output tile (resident across the hidden axis)
    acc_ref: (tm, C_out) f32 VMEM accumulator scratch
    """
    k = pl.program_id(1)

    @pl.when(k == 0)
    def _():
        acc_ref[...] = jnp.zeros_like(acc_ref)

    # fc1 slab: bf16 MXU operands, f32 accumulation.
    x_bf = x_ref[...].astype(jnp.bfloat16)
    h = jnp.dot(x_bf, w1_ref[...], preferred_element_type=jnp.float32)
    h = h + b1_ref[...]                       # f32 bias add
    h = _gelu_f32(h, approximate_gelu)        # f32 elementwise activation
    # Dropout(p=0.0) is an identity -> omitted.

    # fc2 slab, accumulated over hidden-dim tiles in f32.
    acc_ref[...] += jnp.dot(h.astype(jnp.bfloat16), w2_ref[...],
                            preferred_element_type=jnp.float32)

    @pl.when(k == pl.num_programs(1) - 1)
    def _():
        o_ref[...] = (acc_ref[...] + b2_ref[...]).astype(o_ref.dtype)


def _pick_tile(dim, candidates):
    """Largest candidate tile that evenly divides `dim`; else the full dim."""
    for t in candidates:
        if dim % t == 0:
            return t
    return dim


def mlp_forward(x, params, *, approximate_gelu=False):
    """Pallas forward of Mlp.  x: (..., C_in) -> (..., C_out)."""
    w1, b1, w2, b2 = params['w1'], params['b1'], params['w2'], params['b2']
    din, hidden = w1.shape
    dout = w2.shape[1]

    lead = x.shape[:-1]
    m = math.prod(lead) if lead else 1
    xm = x.reshape(m, din)

    # Token tile (sublane axis: multiple of 8 or full), hidden tile (lane axis:
    # multiple of 128 or full).
    tm = _pick_tile(m, (512, 256, 128, 64, 32, 16, 8))
    th = _pick_tile(hidden, (1024, 512, 256, 128))
    grid = (m // tm, hidden // th)

    kernel = partial(_mlp_kernel, approximate_gelu=approximate_gelu)

    out = pl.pallas_call(
        kernel,
        out_shape=jax.ShapeDtypeStruct((m, dout), x.dtype),
        grid_spec=pltpu.PrefetchScalarGridSpec(
            num_scalar_prefetch=0,
            grid=grid,
            in_specs=[
                pl.BlockSpec((tm, din), lambda i, k: (i, 0)),   # x tile
                pl.BlockSpec((din, th), lambda i, k: (0, k)),   # w1 slab
                pl.BlockSpec((1, th),   lambda i, k: (0, k)),   # b1 slab
                pl.BlockSpec((th, dout), lambda i, k: (k, 0)),  # w2 slab
                pl.BlockSpec((1, dout), lambda i, k: (0, 0)),   # b2
            ],
            out_specs=pl.BlockSpec((tm, dout), lambda i, k: (i, 0)),
            scratch_shapes=[pltpu.VMEM((tm, dout), jnp.float32)],
        ),
        compiler_params=pltpu.CompilerParams(
            dimension_semantics=("parallel", "arbitrary"),
            vmem_limit_bytes=32 * 1024 * 1024,
        ),
    )(xm, w1, b1, w2, b2)

    return out.reshape(*lead, dout)


def init_params(key, in_features, hidden_features=None, out_features=None):
    """Mirror weight_init: kaiming_normal_(fan_in, leaky_relu) weights,
    zero biases.  Weights stored in bf16 (MXU operand dtype); biases f32."""
    hidden_features = hidden_features or in_features
    out_features = out_features or in_features
    k1, k2 = jax.random.split(key)
    gain = math.sqrt(2.0 / (1.0 + 0.01 ** 2))   # leaky_relu, negative_slope=0.01

    def kaiming(k, fan_in, shape):
        w = jax.random.normal(k, shape, jnp.float32) * (gain / math.sqrt(fan_in))
        return w.astype(jnp.bfloat16)

    return dict(
        w1=kaiming(k1, in_features, (in_features, hidden_features)),
        b1=jnp.zeros((1, hidden_features), jnp.float32),
        w2=kaiming(k2, hidden_features, (hidden_features, out_features)),
        b2=jnp.zeros((1, out_features), jnp.float32),
    )


def reference(x, params, *, approximate_gelu=False):
    """Pure-JAX reference of Mlp.forward (dropout p=0.0 is identity),
    using the same bf16-operand / f32-accumulate matmul contract."""
    lead = x.shape[:-1]
    din = x.shape[-1]
    xm = x.reshape(-1, din).astype(jnp.bfloat16)
    h = jnp.dot(xm, params['w1'], preferred_element_type=jnp.float32) + params['b1']
    if approximate_gelu:
        h = jax.nn.gelu(h, approximate=True)
    else:
        h = 0.5 * h * (1.0 + jax.scipy.special.erf(h * _SQRT_HALF))  # exact erf
    y = jnp.dot(h.astype(jnp.bfloat16), params['w2'],
                preferred_element_type=jnp.float32) + params['b2']
    return y.reshape(*lead, -1).astype(x.dtype)


if __name__ == "__main__":
    key = jax.random.PRNGKey(0)
    kx, kp = jax.random.split(key)

    # Mlp(in_features=32, hidden_features=128) applied to a [B, N, C] token grid.
    B, N, C, hidden = 2, 8, 32, 128
    params = init_params(kp, C, hidden_features=hidden)
    x = jax.random.normal(kx, (B, N, C), jnp.float32)

    y = jax.block_until_ready(mlp_forward(x, params, approximate_gelu=False))

    ref = reference(x, params, approximate_gelu=False)
    err = float(jnp.max(jnp.abs(y - ref)))
    assert jnp.allclose(y, ref, rtol=2e-3, atol=2e-3), f"max abs err {err}"
    print("KERNEL_OK")
</pallas_src>

<mosaic_0001>
module attributes {stable_mosaic.version = 11 : i64} {
  func.func @_mlp_kernel(%arg0: i32, %arg1: i32, %arg2: memref<16x32xf32, #tpu.memory_space<vmem>>, %arg3: memref<32x128xbf16, #tpu.memory_space<vmem>>, %arg4: memref<1x128xf32, #tpu.memory_space<vmem>>, %arg5: memref<128x32xbf16, #tpu.memory_space<vmem>>, %arg6: memref<1x32xf32, #tpu.memory_space<vmem>>, %arg7: memref<16x32xf32, #tpu.memory_space<vmem>>, %arg8: memref<16x32xf32, #tpu.memory_space<vmem>>) attributes {dimension_semantics = [#tpu.dimension_semantics<parallel>, #tpu.dimension_semantics<arbitrary>], iteration_bounds = array<i64: 1, 1>, scalar_prefetch = 0 : i64, scratch_operands = 1 : i64, tpu.core_type = #tpu.core_type<tc>, window_params = [{transform_indices = @transform_0, window_bounds = array<i64: 16, 32>}, {transform_indices = @transform_1, window_bounds = array<i64: 32, 128>}, {transform_indices = @transform_2, window_bounds = array<i64: 1, 128>}, {transform_indices = @transform_3, window_bounds = array<i64: 128, 32>}, {pipeline_mode = #tpu.pipeline_mode<synchronous>, transform_indices = @transform_4, window_bounds = array<i64: 1, 32>}, {transform_indices = @transform_5, window_bounds = array<i64: 16, 32>}]} {
    %c0_i32 = arith.constant 0 : i32
    %0 = arith.cmpi eq, %arg1, %c0_i32 : i32
    %1 = arith.extui %0 : i1 to i32
    %c0_i32_0 = arith.constant 0 : i32
    %2 = arith.cmpi ne, %1, %c0_i32_0 : i32
    scf.if %2 {
      %cst_31 = arith.constant 0.000000e+00 : f32
      %60 = vector.broadcast %cst_31 : f32 to vector<16x32xf32>
      %c0_32 = arith.constant 0 : index
      %c0_33 = arith.constant 0 : index
      %61 = vector.load %arg8[%c0_32, %c0_33] : memref<16x32xf32, #tpu.memory_space<vmem>>, vector<16x32xf32>
      tpu.vector_store %arg8[%c0_32, %c0_33], %60 {strides = array<i32>} : memref<16x32xf32, #tpu.memory_space<vmem>>, vector<16x32xf32>,
    } else {
    }
    %c0 = arith.constant 0 : index
    %c0_1 = arith.constant 0 : index
    %3 = vector.load %arg2[%c0, %c0_1] : memref<16x32xf32, #tpu.memory_space<vmem>>, vector<16x32xf32>
    %4 = arith.truncf %3 : vector<16x32xf32> to vector<16x32xbf16>
    %c0_2 = arith.constant 0 : index
    %c0_3 = arith.constant 0 : index
    %5 = vector.load %arg3[%c0_2, %c0_3] : memref<32x128xbf16, #tpu.memory_space<vmem>>, vector<32x128xbf16>
    %cst = arith.constant dense<0.000000e+00> : vector<16x128xf32>
    %6 = tpu.matmul %4, %5, %cst {dimension_numbers = #tpu.dot_dimension_numbers<[1], [0], [0], [1], [0, 0, 1, 1], [], []>} : vector<16x32xbf16>, vector<32x128xbf16>, vector<16x128xf32> -> vector<16x128xf32>
    %c0_4 = arith.constant 0 : index
    %c0_5 = arith.constant 0 : index
    %7 = vector.load %arg4[%c0_4, %c0_5] : memref<1x128xf32, #tpu.memory_space<vmem>>, vector<1x128xf32>
    %8 = vector.broadcast %7 : vector<1x128xf32> to vector<16x128xf32>
    %9 = arith.addf %6, %8 : vector<16x128xf32>
    %cst_6 = arith.constant 5.000000e-01 : f32
    %10 = vector.broadcast %cst_6 : f32 to vector<16x128xf32>
    %11 = arith.mulf %10, %9 : vector<16x128xf32>
    %cst_7 = arith.constant 0.707106769 : f32
    %12 = vector.broadcast %cst_7 : f32 to vector<16x128xf32>
    %13 = arith.mulf %9, %12 : vector<16x128xf32>
    %cst_8 = arith.constant 0.000000e+00 : f32
    %14 = vector.broadcast %cst_8 : f32 to vector<16x128xf32>
    %15 = arith.cmpf olt, %13, %14 : vector<16x128xf32>
    %cst_9 = arith.constant -1.000000e+00 : f32
    %cst_10 = arith.constant 1.000000e+00 : f32
    %16 = vector.broadcast %cst_9 : f32 to vector<16x128xf32>
    %17 = vector.broadcast %cst_10 : f32 to vector<16x128xf32>
    %18 = arith.select %15, %16, %17 : vector<16x128xi1>, vector<16x128xf32>
    %19 = math.absf %13 : vector<16x128xf32>
    %cst_11 = arith.constant 0.327591091 : f32
    %20 = vector.broadcast %cst_11 : f32 to vector<16x128xf32>
    %21 = arith.mulf %20, %19 : vector<16x128xf32>
    %cst_12 = arith.constant 1.000000e+00 : f32
    %22 = vector.broadcast %cst_12 : f32 to vector<16x128xf32>
    %23 = arith.addf %22, %21 : vector<16x128xf32>
    %cst_13 = arith.constant 1.000000e+00 : f32
    %24 = vector.broadcast %cst_13 : f32 to vector<16x128xf32>
    %25 = arith.divf %24, %23 : vector<16x128xf32>
    %cst_14 = arith.constant 1.06140542 : f32
    %26 = vector.broadcast %cst_14 : f32 to vector<16x128xf32>
    %27 = arith.mulf %26, %25 : vector<16x128xf32>
    %cst_15 = arith.constant -1.45315206 : f32
    %28 = vector.broadcast %cst_15 : f32 to vector<16x128xf32>
    %29 = arith.addf %27, %28 : vector<16x128xf32>
    %30 = arith.mulf %29, %25 : vector<16x128xf32>
    %cst_16 = arith.constant 1.42141378 : f32
    %31 = vector.broadcast %cst_16 : f32 to vector<16x128xf32>
    %32 = arith.addf %30, %31 : vector<16x128xf32>
    %33 = arith.mulf %32, %25 : vector<16x128xf32>
    %cst_17 = arith.constant -0.284496725 : f32
    %34 = vector.broadcast %cst_17 : f32 to vector<16x128xf32>
    %35 = arith.addf %33, %34 : vector<16x128xf32>
    %36 = arith.mulf %35, %25 : vector<16x128xf32>
    %cst_18 = arith.constant 0.254829586 : f32
    %37 = vector.broadcast %cst_18 : f32 to vector<16x128xf32>
    %38 = arith.addf %36, %37 : vector<16x128xf32>
    %39 = arith.mulf %38, %25 : vector<16x128xf32>
    %cst_19 = arith.constant 0.000000e+00 : f32
    %40 = vector.broadcast %cst_19 : f32 to vector<16x128xf32>
    %41 = arith.subf %40, %19 : vector<16x128xf32>
    %42 = arith.mulf %41, %19 : vector<16x128xf32>
    %43 = math.exp %42 : vector<16x128xf32>
    %44 = arith.mulf %39, %43 : vector<16x128xf32>
    %cst_20 = arith.constant 1.000000e+00 : f32
    %45 = vector.broadcast %cst_20 : f32 to vector<16x128xf32>
    %46 = arith.subf %45, %44 : vector<16x128xf32>
    %47 = arith.mulf %18, %46 : vector<16x128xf32>
    %cst_21 = arith.constant 1.000000e+00 : f32
    %48 = vector.broadcast %cst_21 : f32 to vector<16x128xf32>
    %49 = arith.addf %48, %47 : vector<16x128xf32>
    %50 = arith.mulf %11, %49 : vector<16x128xf32>
    %c0_22 = arith.constant 0 : index
    %c0_23 = arith.constant 0 : index
    %51 = vector.load %arg8[%c0_22, %c0_23] : memref<16x32xf32, #tpu.memory_space<vmem>>, vector<16x32xf32>
    %52 = arith.truncf %50 : vector<16x128xf32> to vector<16x128xbf16>
    %c0_24 = arith.constant 0 : index
    %c0_25 = arith.constant 0 : index
    %53 = vector.load %arg5[%c0_24, %c0_25] : memref<128x32xbf16, #tpu.memory_space<vmem>>, vector<128x32xbf16>
    %cst_26 = arith.constant dense<0.000000e+00> : vector<16x32xf32>
    %54 = tpu.matmul %52, %53, %cst_26 {dimension_numbers = #tpu.dot_dimension_numbers<[1], [0], [0], [1], [0, 0, 1, 1], [], []>} : vector<16x128xbf16>, vector<128x32xbf16>, vector<16x32xf32> -> vector<16x32xf32>
    %55 = arith.addf %51, %54 : vector<16x32xf32>
    %c0_27 = arith.constant 0 : index
    %c0_28 = arith.constant 0 : index
    %56 = vector.load %arg8[%c0_27, %c0_28] : memref<16x32xf32, #tpu.memory_space<vmem>>, vector<16x32xf32>
    tpu.vector_store %arg8[%c0_27, %c0_28], %55 {strides = array<i32>} : memref<16x32xf32, #tpu.memory_space<vmem>>, vector<16x32xf32>,
    %c0_i32_29 = arith.constant 0 : i32
    %57 = arith.cmpi eq, %arg1, %c0_i32_29 : i32
    %58 = arith.extui %57 : i1 to i32
    %c0_i32_30 = arith.constant 0 : i32
    %59 = arith.cmpi ne, %58, %c0_i32_30 : i32
    scf.if %59 {
      %c0_31 = arith.constant 0 : index
      %c0_32 = arith.constant 0 : index
      %60 = vector.load %arg8[%c0_31, %c0_32] : memref<16x32xf32, #tpu.memory_space<vmem>>, vector<16x32xf32>
      %c0_33 = arith.constant 0 : index
      %c0_34 = arith.constant 0 : index
      %61 = vector.load %arg6[%c0_33, %c0_34] : memref<1x32xf32, #tpu.memory_space<vmem>>, vector<1x32xf32>
      %62 = vector.broadcast %61 : vector<1x32xf32> to vector<16x32xf32>
      %63 = arith.addf %60, %62 : vector<16x32xf32>
      %c0_35 = arith.constant 0 : index
      %c0_36 = arith.constant 0 : index
      %64 = vector.load %arg7[%c0_35, %c0_36] : memref<16x32xf32, #tpu.memory_space<vmem>>, vector<16x32xf32>
      tpu.vector_store %arg7[%c0_35, %c0_36], %63 {strides = array<i32>} : memref<16x32xf32, #tpu.memory_space<vmem>>, vector<16x32xf32>,
    } else {
    }
    return
  }
  func.func @transform_0(%arg0: i32, %arg1: i32) -> (i32, i32) {
    %c0_i32 = arith.constant 0 : i32
    %c0_i32_0 = arith.constant 0 : i32
    return %arg0, %c0_i32 : i32, i32
  }
  func.func @transform_1(%arg0: i32, %arg1: i32) -> (i32, i32) {
    %c0_i32 = arith.constant 0 : i32
    %c0_i32_0 = arith.constant 0 : i32
    return %c0_i32, %arg1 : i32, i32
  }
  func.func @transform_2(%arg0: i32, %arg1: i32) -> (i32, i32) {
    %c0_i32 = arith.constant 0 : i32
    %c0_i32_0 = arith.constant 0 : i32
    return %c0_i32, %arg1 : i32, i32
  }
  func.func @transform_3(%arg0: i32, %arg1: i32) -> (i32, i32) {
    %c0_i32 = arith.constant 0 : i32
    %c0_i32_0 = arith.constant 0 : i32
    return %arg1, %c0_i32 : i32, i32
  }
  func.func @transform_4(%arg0: i32, %arg1: i32) -> (i32, i32) {
    %c0_i32 = arith.constant 0 : i32
    %c0_i32_0 = arith.constant 0 : i32
    %c0_i32_1 = arith.constant 0 : i32
    return %c0_i32, %c0_i32_0 : i32, i32
  }
  func.func @transform_5(%arg0: i32, %arg1: i32) -> (i32, i32) {
    %c0_i32 = arith.constant 0 : i32
    %c0_i32_0 = arith.constant 0 : i32
    return %arg0, %c0_i32 : i32, i32
  }
}

</mosaic_0001>

<llo_original>
// kernel: tpu_custom_call.1
$region0: #{tpu_custom_call.1}
  #allocation0 [shape = 'u32[]', space=smem, size = 0x4, offset = 0x4, fixed_abs, tag = 'smem constant byte address 0x4 - core index']
  #allocation1 [shape = 'u32[72,128]{1,0:T(1,128)}', space=vmem, size = 0x9000, scoped, tag = 'internal scratch']
  #allocation2 [shape = 'f32[16,32]{1,0:T(8,128)}', space=vmem, size = 0x2000, scoped, tag = 'scratch operand']
  %s0 = inlined_call_operand.vmem [shape: f32[16,32], index: 0, kind: input, shape index: {}]
  %s1 = inlined_call_operand.vmem [shape: bf16[32,128], index: 1, kind: input, shape index: {}]
  %s2 = inlined_call_operand.vmem [shape: f32[1,128], index: 2, kind: input, shape index: {}]
  %s3 = inlined_call_operand.vmem [shape: bf16[128,32], index: 3, kind: input, shape index: {}]
  %s4 = inlined_call_operand.vmem [shape: f32[1,32], index: 4, kind: input, shape index: {}]
  %s5 = inlined_call_operand.hbm [shape: f32[16,32], index: 5, kind: output, shape index: {}]
  %s6 = sld [smem:[#allocation0]]
  $region38: #{tpu_custom_call.1} parent=0
    _
  %s8 = ssub.s32 1, %s6
  %s9 = scalar_select 0, %s8, %s6
  $region1: #{tpu_custom_call.1} parent=0
    #allocation3 [shape = 'u8[8192]{0}', space=vmem, size = 0x2000, scoped, tag = 'output window, operand 0, single buffered']
    #allocation4 [shape = 's32[1]{0}', space=sflag, size = 0x4, scoped, tag = 'scoped memory for tpu_custom_call.1']
    %10 = vsyncpa [#allocation4], 0
    // Predicated region
    $region2: #{tpu_custom_call.1} parent=1 // pred_check
      _
    $region3: #{tpu_custom_call.1} parent=1 // pred_check_branch
      %12 = sbr.rel (0) target = $region5
    $region4: #{tpu_custom_call.1} parent=1 // pred_region
      _
    $region5: #{tpu_custom_call.1} parent=1 // pred_fallthru
      _
    // Predicated region
    $region6: #{tpu_custom_call.1} parent=1 // pred_check
      _
    $region7: #{tpu_custom_call.1} parent=1 // pred_check_branch
      %14 = sbr.rel (0) target = $region9
    $region8: #{tpu_custom_call.1} parent=1 // pred_region
      _
    $region9: #{tpu_custom_call.1} parent=1 // pred_fallthru
      _
    // Predicated region
    $region10: #{tpu_custom_call.1} parent=1 // pred_check
      _
    $region11: #{tpu_custom_call.1} parent=1 // pred_check_branch
      %16 = sbr.rel (0) target = $region13
    $region12: #{tpu_custom_call.1} parent=1 // pred_region
      _
    $region13: #{tpu_custom_call.1} parent=1 // pred_fallthru
      _
    // Predicated region
    $region14: #{tpu_custom_call.1} parent=1 // pred_check
      _
    $region15: #{tpu_custom_call.1} parent=1 // pred_check_branch
      %18 = sbr.rel (0) target = $region17
    $region16: #{tpu_custom_call.1} parent=1 // pred_region
      _
    $region17: #{tpu_custom_call.1} parent=1 // pred_fallthru
      _
    // Predicated region
    $region18: #{tpu_custom_call.1} parent=1 // pred_check
      _
    $region19: #{tpu_custom_call.1} parent=1 // pred_check_branch
      %20 = sbr.rel (0) target = $region21
    $region20: #{tpu_custom_call.1} parent=1 // pred_region
      _
    $region21: #{tpu_custom_call.1} parent=1 // pred_fallthru
      _
    %p22 = scmp.eq.s32.totalorder 0, 0
    // Predicated region
    $region22: #{tpu_custom_call.1} parent=1 // pred_check
      %p23 = pneg %p22
    $region23: #{tpu_custom_call.1} parent=1 // pred_check_branch
      %25 = sbr.rel (%p23) target = $region25
    $region24: #{tpu_custom_call.1} parent=1 // pred_region
      %vm26 = vcmask 261120
      %27 = vst.msk [vmem:[#allocation2] sm:$0xff] %vm26, 0.0
      %28 = vst.msk [vmem:[#allocation2 + $0x8] sm:$0xff] %vm26, 0.0
    $region25: #{tpu_custom_call.1} parent=1 // pred_fallthru
      _
    %v29 = vld [vmem:[%s0] sm:$0xff]
    %v30 = vld [vmem:[%s0 + $0x8] sm:$0xff]
    %v31 = vpack.c.bf16 %v30, %v29
    %v32 = vld [vmem:[%s1] sm:$0xf]
    %v33 = vld [vmem:[%s1 + $0x4] sm:$0xf]
    %v34 = vld [vmem:[%s1 + $0x8] sm:$0xf]
    %v35 = vld [vmem:[%s1 + $0xc] sm:$0xf]
    %v36 = vld [vmem:[%s2] sm:$0x1]
    %v38 = vperm.slane %v36, 0
    %v44 = vunpack.c.l.b16 %v32
    %v45 = vunpack.c.l.b16 %v33
    %v46 = vunpack.c.l.b16 %v34
    %v47 = vunpack.c.l.b16 %v35
    %v48 = vpack.c.b16 %v45, %v44
    %v49 = vpack.c.b16 %v47, %v46
    %vm52 = vcmask 261120
    %v54 = vsel %vm52, %v31, 0
    %56 = vmatpush.bf16.msra.mxu0 0
    %57 = vmatpush.bf16.msra.mxu0 0
    %58 = vmatpush.bf16.msra.mxu0 0
    %59 = vmatpush.bf16.msra.mxu0 0
    %60 = vmatpush.bf16.msra.mxu0 0
    %61 = vmatpush.bf16.msra.mxu0 0
    %62 = vmatpush.bf16.msra.mxu0 %v49
    %63 = vmatpush.bf16.msra.mxu0 %v48
    %64 = vmatmul.bf16.gmra.mxu0 %v54
    %v65 = vpop.f32.mrf.mxu0
    %v66 = vadd.f32 %v38, %v65
    %v67 = vpop.f32.mrf.mxu0
    %v68 = vadd.f32 %v38, %v67
    %69 = vdwg.mxu0
    %v70 = vmul.f32 %v66, 0.5
    %v71 = vmul.f32 %v68, 0.5
    %v72 = vmul.f32 %v66, 0.70710677
    %v73 = vmul.f32 %v68, 0.70710677
    %vm74 = vcmp.lt.f32.partialorder %v72, 0.0
    %vm75 = vcmp.lt.f32.partialorder %v73, 0.0
    %v76 = vsel %vm74, -1.0, 1.0
    %v77 = vsel %vm75, -1.0, 1.0
    %v78 = vand.u32 2147483647, %v72
    %v79 = vand.u32 2147483647, %v73
    %v80 = vmul.f32 %v78, 0.3275911
    %v81 = vmul.f32 %v79, 0.3275911
    %v82 = vadd.f32 %v80, 1.0
    %v83 = vadd.f32 %v81, 1.0
    %v84 = vrcp.pop %v82
    %v85 = vmul.f32 %v82, %v84
    %v86 = vsub.f32 1.0, %v85
    %v87 = vmul.f32 %v84, %v86
    %v88 = vadd.f32 %v84, %v87
    %vm89 = vweird.f32 %v82
    %vm90 = vweird.f32 %v84
    %vm91 = vmor %vm89, %vm90
    %v92 = vsel %vm91, %v84, %v88
    %v93 = vand.u32 2147483647, %v82
    %vm94 = vcmp.eq.f32.partialorder %v93, 8.507059e+37
    %v95 = vand.u32 %v82, 2147483648
    %v96 = vor.u32 1.1754944e-38, %v95
    %v97 = vsel %vm94, %v96, %v92
    %v98 = vmul.f32 1.0, %v97
    %v99 = vrcp.pop %v83
    %v100 = vmul.f32 %v83, %v99
    %v101 = vsub.f32 1.0, %v100
    %v102 = vmul.f32 %v99, %v101
    %v103 = vadd.f32 %v99, %v102
    %vm104 = vweird.f32 %v83
    %vm105 = vweird.f32 %v99
    %vm106 = vmor %vm104, %vm105
    %v107 = vsel %vm106, %v99, %v103
    %v108 = vand.u32 2147483647, %v83
    %vm109 = vcmp.eq.f32.partialorder %v108, 8.507059e+37
    %v110 = vand.u32 %v83, 2147483648
    %v111 = vor.u32 1.1754944e-38, %v110
    %v112 = vsel %vm109, %v111, %v107
    %v113 = vmul.f32 1.0, %v112
    %v114 = vmul.f32 %v98, 1.0614054
    %v115 = vmul.f32 %v113, 1.0614054
    %v116 = vadd.f32 %v114, -1.4531521
    %v117 = vadd.f32 %v115, -1.4531521
    %v118 = vmul.f32 %v116, %v98
    %v119 = vmul.f32 %v117, %v113
    %v120 = vadd.f32 %v118, 1.4214138
    %v121 = vadd.f32 %v119, 1.4214138
    %v122 = vmul.f32 %v120, %v98
    %v123 = vmul.f32 %v121, %v113
    %v124 = vadd.f32 %v122, -0.28449672
    %v125 = vadd.f32 %v123, -0.28449672
    %v126 = vmul.f32 %v124, %v98
    %v127 = vmul.f32 %v125, %v113
    %v128 = vadd.f32 %v126, 0.2548296
    %v129 = vadd.f32 %v127, 0.2548296
    %v130 = vmul.f32 %v128, %v98
    %v131 = vmul.f32 %v129, %v113
    %v132 = vsub.f32 0.0, %v78
    %v133 = vsub.f32 0.0, %v79
    %v134 = vmul.f32 %v132, %v78
    %v135 = vmul.f32 %v133, %v79
    %v136 = vmul.f32 %v134, 1.442695
    %v137 = vpow.pop %v136
    %v138 = vmul.f32 %v135, 1.442695
    %v139 = vpow.pop %v138
    %v140 = vmul.f32 %v130, %v137
    %v141 = vmul.f32 %v131, %v139
    %v142 = vsub.f32 1.0, %v140
    %v143 = vsub.f32 1.0, %v141
    %v144 = vmul.f32 %v76, %v142
    %v145 = vmul.f32 %v77, %v143
    %v146 = vadd.f32 %v144, 1.0
    %v147 = vadd.f32 %v145, 1.0
    %v148 = vmul.f32 %v70, %v146
    %v149 = vmul.f32 %v71, %v147
    %v150 = vld [vmem:[#allocation2] sm:$0xff]
    %v151 = vld [vmem:[#allocation2 + $0x8] sm:$0xff]
    %v152 = vpack.c.bf16 %v149, %v148
    %v153 = vld [vmem:[%s3] sm:$0xf]
    %v154 = vld [vmem:[%s3 + $0x4] sm:$0xf]
    %v155 = vld [vmem:[%s3 + $0x8] sm:$0xf]
    %v156 = vld [vmem:[%s3 + $0xc] sm:$0xf]
    %v157 = vld [vmem:[%s3 + $0x10] sm:$0xf]
    %v158 = vld [vmem:[%s3 + $0x14] sm:$0xf]
    %v159 = vld [vmem:[%s3 + $0x18] sm:$0xf]
    %v160 = vld [vmem:[%s3 + $0x1c] sm:$0xf]
    %v161 = vld [vmem:[%s3 + $0x20] sm:$0xf]
    %v162 = vld [vmem:[%s3 + $0x24] sm:$0xf]
    %v163 = vld [vmem:[%s3 + $0x28] sm:$0xf]
    %v164 = vld [vmem:[%s3 + $0x2c] sm:$0xf]
    %v165 = vld [vmem:[%s3 + $0x30] sm:$0xf]
    %v166 = vld [vmem:[%s3 + $0x34] sm:$0xf]
    %v167 = vld [vmem:[%s3 + $0x38] sm:$0xf]
    %v168 = vld [vmem:[%s3 + $0x3c] sm:$0xf]
    %v185 = vunpack.c.l.b16 %v153
    %v186 = vunpack.c.l.b16 %v154
    %v187 = vunpack.c.l.b16 %v155
    %v188 = vunpack.c.l.b16 %v156
    %v189 = vunpack.c.l.b16 %v157
    %v190 = vunpack.c.l.b16 %v158
    %v191 = vunpack.c.l.b16 %v159
    %v192 = vunpack.c.l.b16 %v160
    %v193 = vunpack.c.l.b16 %v161
    %v194 = vunpack.c.l.b16 %v162
    %v195 = vunpack.c.l.b16 %v163
    %v196 = vunpack.c.l.b16 %v164
    %v197 = vunpack.c.l.b16 %v165
    %v198 = vunpack.c.l.b16 %v166
    %v199 = vunpack.c.l.b16 %v167
    %v200 = vunpack.c.l.b16 %v168
    %v201 = vpack.c.b16 %v186, %v185
    %v202 = vpack.c.b16 %v188, %v187
    %v203 = vpack.c.b16 %v190, %v189
    %v204 = vpack.c.b16 %v192, %v191
    %v205 = vpack.c.b16 %v194, %v193
    %v206 = vpack.c.b16 %v196, %v195
    %v207 = vpack.c.b16 %v198, %v197
    %v208 = vpack.c.b16 %v200, %v199
    %217 = vmatpush.bf16.msra.mxu0 %v208
    %218 = vmatpush.bf16.msra.mxu0 %v207
    %219 = vmatpush.bf16.msra.mxu0 %v206
    %220 = vmatpush.bf16.msra.mxu0 %v205
    %221 = vmatpush.bf16.msra.mxu0 %v204
    %222 = vmatpush.bf16.msra.mxu0 %v203
    %223 = vmatpush.bf16.msra.mxu0 %v202
    %224 = vmatpush.bf16.msra.mxu0 %v201
    %225 = vmatmul.bf16.gmra.mxu0 %v152
    %v226 = vpop.f32.mrf.mxu0
    %v227 = vadd.f32 0.0, %v226
    %v228 = vpop.f32.mrf.mxu0
    %v229 = vadd.f32 0.0, %v228
    %230 = vdwg.mxu0
    %v231 = vadd.f32 %v150, %v227
    %v232 = vadd.f32 %v151, %v229
    %233 = vst.msk [vmem:[#allocation2] sm:$0xff] %vm52, %v231
    %234 = vst.msk [vmem:[#allocation2 + $0x8] sm:$0xff] %vm52, %v232
    // Predicated region
    $region26: #{tpu_custom_call.1} parent=1 // pred_check
      %p235 = pneg %p22
    $region27: #{tpu_custom_call.1} parent=1 // pred_check_branch
      %237 = sbr.rel (%p235) target = $region29
    $region28: #{tpu_custom_call.1} parent=1 // pred_region
      %v238 = vld [vmem:[#allocation2] sm:$0xff]
      %v239 = vld [vmem:[#allocation2 + $0x8] sm:$0xff]
      %v240 = vld [vmem:[%s4] sm:$0x1]
      %v242 = vperm.slane %v240, 0
      %v244 = vadd.f32 %v238, %v242
      %v245 = vadd.f32 %v239, %v242
      %246 = vst.msk [vmem:[#allocation3] sm:$0xff] %vm52, %v244
      %247 = vst.msk [vmem:[#allocation3 + $0x8] sm:$0xff] %vm52, %v245
    $region29: #{tpu_custom_call.1} parent=1 // pred_fallthru
      _
    // Predicated region
    $region30: #{tpu_custom_call.1} parent=1 // pred_check
      _
    $region31: #{tpu_custom_call.1} parent=1 // pred_check_branch
      %249 = sbr.rel (0) target = $region33
    $region32: #{tpu_custom_call.1} parent=1 // pred_region
      %251 = vsyncadd [#allocation4], 0
      %s252 = sshll.u32 [#allocation3], 4
      %s253 = int_to_ptr.vmem [resolvable:$true] %s252
      %s254 = sshll.u32 %s5, 4
      %s255 = int_to_ptr.hbm [resolvable:$true] %s254
      %260 = dma.vmem_to_hbm [thread:$0]  %s253, 256, %s255, [#allocation4], 128, 128, 8
    $region33: #{tpu_custom_call.1} parent=1 // pred_fallthru
      _
    // Predicated region
    $region34: #{tpu_custom_call.1} parent=1 // pred_check
      _
    $region35: #{tpu_custom_call.1} parent=1 // pred_check_branch
      %262 = sbr.rel (0) target = $region37
    $region36: #{tpu_custom_call.1} parent=1 // pred_region
      %264 = dma.done [#allocation4], 256
    $region37: #{tpu_custom_call.1} parent=1 // pred_fallthru
      _
    %265 = vsyncpa [#allocation4], 1

</llo_original>
